<compile_context>
chip_gen: v7x
topology: tpu7x:2x2x1
jax: 0.10.0
libtpu: 0.0.40
codegen_flags: <defaults>
</compile_context>

<pallas_src>
import math
import functools

import jax
import jax.numpy as jnp
from jax.experimental import pallas as pl
from jax.experimental.pallas import tpu as pltpu


# --------------------------------------------------------------------------- #
# VMEM budgeting                                                              #
# --------------------------------------------------------------------------- #
def _vmem_limit_bytes(buffer_bytes):
    """Budget VMEM from actual buffer sizes, capped below physical capacity."""
    try:
        cap = int(pltpu.get_tpu_info().vmem_capacity_bytes)
    except Exception:                       # pragma: no cover - conservative v7x
        cap = 64 * 1024 * 1024
    want = int(buffer_bytes * 1.25) + 4 * 1024 * 1024   # headroom for Mosaic scratch
    return max(16 * 1024 * 1024, min(want, int(cap * 0.85)))


# --------------------------------------------------------------------------- #
# Kernel 1: fused QKV projection (bf16 MXU operands, f32 accumulate).         #
# q is pre-scaled by 1/sqrt(head_dim) here so kernel 2 never rescales.        #
# --------------------------------------------------------------------------- #
def _qkv_proj_kernel(x_ref, w_ref, b_ref, q_ref, k_ref, v_ref, *, C, q_scale):
    x = x_ref[0]                                              # (tile_t, C) bf16
    qkv = jnp.dot(x, w_ref[...],
                  preferred_element_type=jnp.float32) + b_ref[...]   # (t, 3C) f32
    q_ref[0] = (qkv[:, 0 * C:1 * C] * q_scale).astype(q_ref.dtype)
    k_ref[0] = qkv[:, 1 * C:2 * C].astype(k_ref.dtype)
    v_ref[0] = qkv[:, 2 * C:3 * C].astype(v_ref.dtype)


# --------------------------------------------------------------------------- #
# Kernel 2: flash attention (online softmax) + fused output projection.       #
# Triangular grid: every step has ki <= qi by construction.                   #
# --------------------------------------------------------------------------- #
def _flash_attn_kernel(qi_of_ref, ki_of_ref,               # scalar-prefetch (SMEM)
                       q_ref, k_ref, v_ref, wp_ref, bp_ref, o_ref,
                       m_sc, l_sc, acc_sc, *, num_head, head_dim, tile_t):
    t = pl.program_id(1)
    qi = qi_of_ref[t]
    ki = ki_of_ref[t]

    @pl.when(ki == 0)
    def _init():
        m_sc[...] = jnp.full(m_sc.shape, -jnp.inf, dtype=m_sc.dtype)
        l_sc[...] = jnp.zeros(l_sc.shape, dtype=l_sc.dtype)
        acc_sc[...] = jnp.zeros(acc_sc.shape, dtype=acc_sc.dtype)

    q = q_ref[0]                                              # (t, C) bf16 (pre-scaled)
    k = k_ref[0]                                              # (t, C) bf16
    v = v_ref[0]                                              # (t, C) bf16

    # One additive causal bias per kv step, hoisted out of the head loop.
    # Off-diagonal (ki < qi) tiles are fully allowed; only the diagonal tile
    # gets the intra-tile triangular mask.
    row = jax.lax.broadcasted_iota(jnp.int32, (tile_t, tile_t), 0)   # query index
    col = jax.lax.broadcasted_iota(jnp.int32, (tile_t, tile_t), 1)   # key index
    allowed = jnp.logical_or(ki < qi, row >= col)
    bias = jnp.where(allowed, jnp.float32(0.0), jnp.float32(-1e30))  # (t, t) f32

    for h in range(num_head):                                 # static, small
        sl = slice(h * head_dim, (h + 1) * head_dim)          # static lane slice
        qh = q[:, sl]                                         # (t, D)
        kh = k[:, sl]
        vh = v[:, sl]

        # q @ k^T via dot_general (contract head_dim), f32 accumulation.
        s = jax.lax.dot_general(
            qh, kh, (((1,), (1,)), ((), ())),
            preferred_element_type=jnp.float32) + bias        # (t, t) f32

        m_prev = m_sc[h]                                      # (t, 1) f32
        m_new = jnp.maximum(m_prev, jnp.max(s, axis=-1, keepdims=True))
        alpha = jnp.exp(m_prev - m_new)                       # f32 (EUP)
        p = jnp.exp(s - m_new)                                # (t, t) f32

        l_sc[h] = alpha * l_sc[h] + jnp.sum(p, axis=-1, keepdims=True)
        acc_sc[:, sl] = alpha * acc_sc[:, sl] + jnp.dot(
            p.astype(v.dtype), vh, preferred_element_type=jnp.float32)
        m_sc[h] = m_new

    @pl.when(ki == qi)        # last kv step for this q tile (triangular order)
    def _finalize():
        # Exact per-head normalization (tiny (t,1) op -> exact is free).
        for h in range(num_head):
            sl = slice(h * head_dim, (h + 1) * head_dim)
            inv_l = pl.reciprocal(l_sc[h], approx=False)      # (t, 1)
            acc_sc[:, sl] = acc_sc[:, sl] * inv_l
        # Fused output projection (bf16 MXU, f32 accumulate, f32 bias).
        y = acc_sc[...].astype(wp_ref.dtype)                  # (t, C) bf16
        out = jnp.dot(y, wp_ref[...],
                      preferred_element_type=jnp.float32) + bp_ref[...]
        o_ref[0] = out.astype(o_ref.dtype)


# --------------------------------------------------------------------------- #
# Wrapper                                                                     #
# --------------------------------------------------------------------------- #
def causal_self_attention(x, w_qkv, b_qkv, w_proj, b_proj, *, num_head,
                          tile_t=256, out_dtype=None):
    """Forward pass matching the PyTorch CausalSelfAttention module.

    Weights are stored pre-transposed: w_qkv (C, 3C), w_proj (C, C), so the
    kernel computes x @ W + b (== torch's x @ W.T + b).

    tile_t: 256 fills the 256-wide MXU on v6e/v7x; use 128 on v5e.
    """
    B, T, C = x.shape
    assert C % num_head == 0
    D = C // num_head
    tile_t = min(tile_t, T)
    assert T % tile_t == 0, "sequence length must be divisible by the tile size"
    n_t = T // tile_t
    scale = 1.0 / math.sqrt(D)
    out_dtype = x.dtype if out_dtype is None else out_dtype

    # bf16 MXU operands; accumulation and softmax stats stay f32 in-kernel.
    x_bf = x.astype(jnp.bfloat16)
    w_qkv_bf = w_qkv.astype(jnp.bfloat16)
    w_proj_bf = w_proj.astype(jnp.bfloat16)
    b_qkv_f32 = b_qkv.astype(jnp.float32)
    b_proj_f32 = b_proj.astype(jnp.float32)

    BF16, F32 = 2, 4
    out_bytes = jnp.dtype(out_dtype).itemsize

    # ---- Kernel 1: QKV projection -> q (pre-scaled), k, v in (B, T, C) bf16 ---- #
    k1_bytes = (2 * tile_t * C * BF16            # x (double-buffered)
                + C * 3 * C * BF16               # W_qkv (single-buffered)
                + 3 * C * F32                    # b_qkv
                + 3 * 2 * tile_t * C * BF16)     # q, k, v outputs (double-buffered)

    q, k, v = pl.pallas_call(
        functools.partial(_qkv_proj_kernel, C=C, q_scale=scale),
        out_shape=tuple(jax.ShapeDtypeStruct((B, T, C), jnp.bfloat16)
                        for _ in range(3)),
        grid_spec=pltpu.PrefetchScalarGridSpec(
            num_scalar_prefetch=0,
            grid=(B, n_t),
            in_specs=[
                pl.BlockSpec((1, tile_t, C), lambda b, t: (b, t, 0)),       # x
                pl.BlockSpec((C, 3 * C), lambda b, t: (0, 0),
                             pipeline_mode=pl.Buffered(1)),                 # W_qkv (resident, 1 buf)
                pl.BlockSpec((1, 3 * C), lambda b, t: (0, 0),
                             pipeline_mode=pl.Buffered(1)),                 # b_qkv (resident, 1 buf)
            ],
            out_specs=[
                pl.BlockSpec((1, tile_t, C), lambda b, t: (b, t, 0)),
                pl.BlockSpec((1, tile_t, C), lambda b, t: (b, t, 0)),
                pl.BlockSpec((1, tile_t, C), lambda b, t: (b, t, 0)),
            ],
        ),
        compiler_params=pltpu.CompilerParams(
            dimension_semantics=("parallel", "parallel"),
            vmem_limit_bytes=_vmem_limit_bytes(k1_bytes)),
    )(x_bf, w_qkv_bf, b_qkv_f32)

    # ---- Kernel 2: flash attention + output projection (triangular grid) ---- #
    # Flattened causal enumeration: for each q tile qi, kv tiles 0..qi.
    qi_list, ki_list = [], []
    for qi_ in range(n_t):
        for ki_ in range(qi_ + 1):
            qi_list.append(qi_)
            ki_list.append(ki_)
    n_tri = len(qi_list)                         # n_t * (n_t + 1) / 2
    qi_of = jnp.asarray(qi_list, dtype=jnp.int32)
    ki_of = jnp.asarray(ki_list, dtype=jnp.int32)

    k2_bytes = (3 * 2 * tile_t * C * BF16        # q, k, v tiles (double-buffered)
                + C * C * BF16 + C * F32         # W_proj + b_proj (single-buffered)
                + 2 * tile_t * C * out_bytes     # output tile (double-buffered)
                + 2 * num_head * tile_t * F32    # m, l scratch
                + tile_t * C * F32)              # acc scratch

    attn_cost = pl.CostEstimate(
        flops=int(2 * B * num_head * T * T * D        # QK^T + PV, halved (causal)
                  + 2 * B * T * C * C),               # output projection
        transcendentals=int(B * num_head * T * T // 2),
        bytes_accessed=int(2 * 3 * B * T * C          # q, k, v (bf16)
                           + 2 * C * C + 4 * C        # W_proj (bf16) + b_proj (f32)
                           + out_bytes * B * T * C))  # output

    kernel = functools.partial(_flash_attn_kernel, num_head=num_head,
                               head_dim=D, tile_t=tile_t)

    out = pl.pallas_call(
        kernel,
        out_shape=jax.ShapeDtypeStruct((B, T, C), out_dtype),
        grid_spec=pltpu.PrefetchScalarGridSpec(
            num_scalar_prefetch=2,                    # qi_of, ki_of -> SMEM
            grid=(B, n_tri),
            in_specs=[
                # q tile: constant across the kv walk of one q tile -> resident.
                pl.BlockSpec((1, tile_t, C),
                             lambda b, t, qi_of, ki_of: (b, qi_of[t], 0)),
                # k / v tiles: one fetch per (qi, ki) pair, never a dead fetch.
                pl.BlockSpec((1, tile_t, C),
                             lambda b, t, qi_of, ki_of: (b, ki_of[t], 0)),
                pl.BlockSpec((1, tile_t, C),
                             lambda b, t, qi_of, ki_of: (b, ki_of[t], 0)),
                # Resident weights, single-buffered.
                pl.BlockSpec((C, C), lambda b, t, qi_of, ki_of: (0, 0),
                             pipeline_mode=pl.Buffered(1)),
                pl.BlockSpec((1, C), lambda b, t, qi_of, ki_of: (0, 0),
                             pipeline_mode=pl.Buffered(1)),
            ],
            out_specs=pl.BlockSpec((1, tile_t, C),
                                   lambda b, t, qi_of, ki_of: (b, qi_of[t], 0)),
            scratch_shapes=[
                pltpu.VMEM((num_head, tile_t, 1), jnp.float32),   # running max m
                pltpu.VMEM((num_head, tile_t, 1), jnp.float32),   # running sum l
                pltpu.VMEM((tile_t, C), jnp.float32),             # output accumulator
            ],
        ),
        compiler_params=pltpu.CompilerParams(
            dimension_semantics=("parallel", "arbitrary"),
            vmem_limit_bytes=_vmem_limit_bytes(k2_bytes)),
        cost_estimate=attn_cost,
    )(qi_of, ki_of, q, k, v, w_proj_bf, b_proj_f32)

    return out


# --------------------------------------------------------------------------- #
# Pure-JAX f32 reference (torch semantics) for verification                   #
# --------------------------------------------------------------------------- #
def _reference(x, w_qkv, b_qkv, w_proj, b_proj, num_head):
    B, T, C = x.shape
    D = C // num_head
    qkv = x @ w_qkv + b_qkv[0]
    q, k, v = qkv[..., :C], qkv[..., C:2 * C], qkv[..., 2 * C:]

    def heads(t):
        return t.reshape(B, T, num_head, D).transpose(0, 2, 1, 3)

    q, k, v = heads(q), heads(k), heads(v)
    scores = jnp.einsum('bhtd,bhsd->bhts', q, k) / math.sqrt(D)
    mask = jnp.tril(jnp.ones((T, T), bool))
    scores = jnp.where(mask, scores, -1e30)
    p = jax.nn.softmax(scores, axis=-1)
    y = jnp.einsum('bhts,bhsd->bhtd', p, v)
    y = y.transpose(0, 2, 1, 3).reshape(B, T, C)
    return y @ w_proj + b_proj[0]


if __name__ == "__main__":
    # Small shapes consistent with the module: B=2, T=8, d_model=32, heads=4.
    B, T, d_model, num_head = 2, 8, 32, 4

    key = jax.random.PRNGKey(0)
    kx, k1, k2, k3, k4 = jax.random.split(key, 5)

    x = jax.random.normal(kx, (B, T, d_model), dtype=jnp.float32)

    # nn.Linear(d_model, 3*d_model) -> torch weight (3C, C); stored transposed (C, 3C).
    w_qkv = 0.02 * jax.random.normal(k1, (d_model, 3 * d_model), dtype=jnp.float32)
    b_qkv = 0.02 * jax.random.normal(k2, (1, 3 * d_model), dtype=jnp.float32)
    # nn.Linear(d_model, d_model)
    w_proj = 0.02 * jax.random.normal(k3, (d_model, d_model), dtype=jnp.float32)
    b_proj = 0.02 * jax.random.normal(k4, (1, d_model), dtype=jnp.float32)

    out = causal_self_attention(x, w_qkv, b_qkv, w_proj, b_proj,
                                num_head=num_head)
    out = jax.block_until_ready(out)

    ref = _reference(x, w_qkv, b_qkv, w_proj, b_proj, num_head)
    assert out.shape == (B, T, d_model)
    # bf16 MXU operands -> loosened tolerance vs f32 reference.
    assert jnp.allclose(out, ref, atol=2e-2, rtol=2e-2), (
        float(jnp.max(jnp.abs(out - ref))))

    print("KERNEL_OK")
</pallas_src>

<mosaic_0001>
module attributes {stable_mosaic.version = 11 : i64} {
  func.func @_qkv_proj_kernel(%arg0: i32, %arg1: i32, %arg2: memref<1x8x32xbf16, #tpu.memory_space<vmem>>, %arg3: memref<32x96xbf16, #tpu.memory_space<vmem>>, %arg4: memref<1x96xf32, #tpu.memory_space<vmem>>, %arg5: memref<1x8x32xbf16, #tpu.memory_space<vmem>>, %arg6: memref<1x8x32xbf16, #tpu.memory_space<vmem>>, %arg7: memref<1x8x32xbf16, #tpu.memory_space<vmem>>) attributes {dimension_semantics = [#tpu.dimension_semantics<parallel>, #tpu.dimension_semantics<parallel>], iteration_bounds = array<i64: 2, 1>, scalar_prefetch = 0 : i64, scratch_operands = 0 : i64, tpu.core_type = #tpu.core_type<tc>, window_params = [{transform_indices = @transform_0, window_bounds = array<i64: 1, 8, 32>}, {pipeline_mode = #tpu.pipeline_mode<synchronous>, transform_indices = @transform_1, window_bounds = array<i64: 32, 96>}, {pipeline_mode = #tpu.pipeline_mode<synchronous>, transform_indices = @transform_2, window_bounds = array<i64: 1, 96>}, {transform_indices = @transform_3, window_bounds = array<i64: 1, 8, 32>}, {transform_indices = @transform_4, window_bounds = array<i64: 1, 8, 32>}, {transform_indices = @transform_5, window_bounds = array<i64: 1, 8, 32>}]} {
    %c0 = arith.constant 0 : index
    %c0_0 = arith.constant 0 : index
    %c0_1 = arith.constant 0 : index
    %0 = vector.load %arg2[%c0, %c0_0, %c0_1] : memref<1x8x32xbf16, #tpu.memory_space<vmem>>, vector<1x8x32xbf16>
    %1 = vector.shape_cast %0 : vector<1x8x32xbf16> to vector<8x32xbf16>
    %c0_2 = arith.constant 0 : index
    %c0_3 = arith.constant 0 : index
    %2 = vector.load %arg3[%c0_2, %c0_3] : memref<32x96xbf16, #tpu.memory_space<vmem>>, vector<32x96xbf16>
    %cst = arith.constant dense<0.000000e+00> : vector<8x96xf32>
    %3 = tpu.matmul %1, %2, %cst {dimension_numbers = #tpu.dot_dimension_numbers<[1], [0], [0], [1], [0, 0, 1, 1], [], []>} : vector<8x32xbf16>, vector<32x96xbf16>, vector<8x96xf32> -> vector<8x96xf32>
    %c0_4 = arith.constant 0 : index
    %c0_5 = arith.constant 0 : index
    %4 = vector.load %arg4[%c0_4, %c0_5] : memref<1x96xf32, #tpu.memory_space<vmem>>, vector<1x96xf32>
    %5 = vector.broadcast %4 : vector<1x96xf32> to vector<8x96xf32>
    %6 = arith.addf %3, %5 : vector<8x96xf32>
    %7 = vector.extract_strided_slice %6 {offsets = [0, 0], sizes = [8, 32], strides = [1, 1]} : vector<8x96xf32> to vector<8x32xf32>
    %cst_6 = arith.constant 0.353553385 : f32
    %8 = vector.broadcast %cst_6 : f32 to vector<8x32xf32>
    %9 = arith.mulf %7, %8 : vector<8x32xf32>
    %10 = arith.truncf %9 : vector<8x32xf32> to vector<8x32xbf16>
    %c0_7 = arith.constant 0 : index
    %c0_8 = arith.constant 0 : index
    %c0_9 = arith.constant 0 : index
    %11 = vector.load %arg5[%c0_7, %c0_8, %c0_9] : memref<1x8x32xbf16, #tpu.memory_space<vmem>>, vector<1x8x32xbf16>
    %12 = vector.shape_cast %11 : vector<1x8x32xbf16> to vector<8x32xbf16>
    %13 = vector.shape_cast %10 : vector<8x32xbf16> to vector<1x8x32xbf16>
    tpu.vector_store %arg5[%c0_7, %c0_8, %c0_9], %13 {strides = array<i32>} : memref<1x8x32xbf16, #tpu.memory_space<vmem>>, vector<1x8x32xbf16>,
    %14 = vector.extract_strided_slice %6 {offsets = [0, 32], sizes = [8, 32], strides = [1, 1]} : vector<8x96xf32> to vector<8x32xf32>
    %15 = arith.truncf %14 : vector<8x32xf32> to vector<8x32xbf16>
    %c0_10 = arith.constant 0 : index
    %c0_11 = arith.constant 0 : index
    %c0_12 = arith.constant 0 : index
    %16 = vector.load %arg6[%c0_10, %c0_11, %c0_12] : memref<1x8x32xbf16, #tpu.memory_space<vmem>>, vector<1x8x32xbf16>
    %17 = vector.shape_cast %16 : vector<1x8x32xbf16> to vector<8x32xbf16>
    %18 = vector.shape_cast %15 : vector<8x32xbf16> to vector<1x8x32xbf16>
    tpu.vector_store %arg6[%c0_10, %c0_11, %c0_12], %18 {strides = array<i32>} : memref<1x8x32xbf16, #tpu.memory_space<vmem>>, vector<1x8x32xbf16>,
    %19 = vector.extract_strided_slice %6 {offsets = [0, 64], sizes = [8, 32], strides = [1, 1]} : vector<8x96xf32> to vector<8x32xf32>
    %20 = arith.truncf %19 : vector<8x32xf32> to vector<8x32xbf16>
    %c0_13 = arith.constant 0 : index
    %c0_14 = arith.constant 0 : index
    %c0_15 = arith.constant 0 : index
    %21 = vector.load %arg7[%c0_13, %c0_14, %c0_15] : memref<1x8x32xbf16, #tpu.memory_space<vmem>>, vector<1x8x32xbf16>
    %22 = vector.shape_cast %21 : vector<1x8x32xbf16> to vector<8x32xbf16>
    %23 = vector.shape_cast %20 : vector<8x32xbf16> to vector<1x8x32xbf16>
    tpu.vector_store %arg7[%c0_13, %c0_14, %c0_15], %23 {strides = array<i32>} : memref<1x8x32xbf16, #tpu.memory_space<vmem>>, vector<1x8x32xbf16>,
    return
  }
  func.func @transform_0(%arg0: i32, %arg1: i32) -> (i32, i32, i32) {
    %c0_i32 = arith.constant 0 : i32
    %c0_i32_0 = arith.constant 0 : i32
    return %arg0, %arg1, %c0_i32 : i32, i32, i32
  }
  func.func @transform_1(%arg0: i32, %arg1: i32) -> (i32, i32) {
    %c0_i32 = arith.constant 0 : i32
    %c0_i32_0 = arith.constant 0 : i32
    %c0_i32_1 = arith.constant 0 : i32
    return %c0_i32, %c0_i32_0 : i32, i32
  }
  func.func @transform_2(%arg0: i32, %arg1: i32) -> (i32, i32) {
    %c0_i32 = arith.constant 0 : i32
    %c0_i32_0 = arith.constant 0 : i32
    %c0_i32_1 = arith.constant 0 : i32
    return %c0_i32, %c0_i32_0 : i32, i32
  }
  func.func @transform_3(%arg0: i32, %arg1: i32) -> (i32, i32, i32) {
    %c0_i32 = arith.constant 0 : i32
    %c0_i32_0 = arith.constant 0 : i32
    return %arg0, %arg1, %c0_i32 : i32, i32, i32
  }
  func.func @transform_4(%arg0: i32, %arg1: i32) -> (i32, i32, i32) {
    %c0_i32 = arith.constant 0 : i32
    %c0_i32_0 = arith.constant 0 : i32
    return %arg0, %arg1, %c0_i32 : i32, i32, i32
  }
  func.func @transform_5(%arg0: i32, %arg1: i32) -> (i32, i32, i32) {
    %c0_i32 = arith.constant 0 : i32
    %c0_i32_0 = arith.constant 0 : i32
    return %arg0, %arg1, %c0_i32 : i32, i32, i32
  }
}

</mosaic_0001>

<llo_original>
// kernel: tpu_custom_call.1
$region0: #{tpu_custom_call.1}
  #allocation0 [shape = 'u32[]', space=smem, size = 0x4, offset = 0x4, fixed_abs, tag = 'smem constant byte address 0x4 - core index']
  #allocation1 [shape = 'u32[144,128]{1,0:T(1,128)}', space=vmem, size = 0x12000, scoped, tag = 'internal scratch']
  %s0 = inlined_call_operand.hbm [shape: bf16[2,8,32], index: 0, kind: input, shape index: {}]
  %s1 = inlined_call_operand.hbm [shape: bf16[32,96], index: 1, kind: input, shape index: {}]
  %s2 = inlined_call_operand.vmem [shape: f32[1,96], index: 2, kind: input, shape index: {}]
  %s3 = inlined_call_operand.hbm [shape: bf16[2,8,32], index: 3, kind: output, shape index: {0}]
  %s4 = inlined_call_operand.hbm [shape: bf16[2,8,32], index: 4, kind: output, shape index: {1}]
  %s5 = inlined_call_operand.hbm [shape: bf16[2,8,32], index: 5, kind: output, shape index: {2}]
  %6 = xla_tuple %s3, %s4, %s5
  %s7 = sld [smem:[#allocation0]]
  $region69: #{tpu_custom_call.1} parent=0
    _
  %s9 = ssub.s32 1, %s7
  %s10 = scalar_select 0, %s9, %s7
  $region1: #{tpu_custom_call.1} parent=0
    #allocation2 [shape = 'u8[4096]{0}', space=vmem, size = 0x1000, scoped, tag = 'input window, operand 0']
    #allocation3 [shape = 's32[2]{0}', space=sflag, size = 0x8, scoped, tag = 'scoped memory for tpu_custom_call.1']
    #allocation4 [shape = 's32[2]{0}', space=sflag, size = 0x8, scoped, tag = 'scoped memory for tpu_custom_call.1']
    #allocation5 [shape = 'u8[8192]{0}', space=vmem, size = 0x2000, scoped, tag = 'input window, operand 1, single buffered']
    #allocation6 [shape = 's32[1]{0}', space=sflag, size = 0x4, scoped, tag = 'scoped memory for tpu_custom_call.1']
    #allocation7 [shape = 'u8[4096]{0}', space=vmem, size = 0x1000, scoped, tag = 'output window, operand 0']
    #allocation8 [shape = 'u8[4096]{0}', space=vmem, size = 0x1000, scoped, tag = 'output window, operand 1']
    #allocation9 [shape = 's32[2]{0}', space=sflag, size = 0x8, scoped, tag = 'scoped memory for tpu_custom_call.1']
    #allocation10 [shape = 'u8[4096]{0}', space=vmem, size = 0x1000, scoped, tag = 'output window, operand 2']
    %11 = vsyncpa [#allocation3], 0
    %s12 = scalar_lea.sflag [#allocation3], 1
    %13 = vsyncpa %s12, 0
    %14 = vsyncpa [#allocation6], 0
    %15 = vsyncpa [#allocation4], 0
    %s16 = scalar_lea.sflag [#allocation4], 1
    %17 = vsyncpa %s16, 0
    %18 = vsyncpa [#allocation9], 0
    %s19 = scalar_lea.sflag [#allocation9], 1
    %20 = vsyncpa %s19, 0
    loop: start=0, step=1, limit=4
    $region2: #{tpu_custom_call.1} parent=1 // loop_pre_header
      _
    $region3: #{tpu_custom_call.1} parent=1 // loop_header
      %s22 = sphi 0, %s26
      %p23 = scmp.ge.s32.totalorder %s22, 4
      %s29 = sphi 0, %s41
      %s30 = sphi 0, %s37
      %s31 = sphi 0, %s29
      %s32 = sphi 0, %s30
      %s33 = sphi 0, %s31
      %s34 = sphi 0, %s32
      %s46 = sphi 0, %s48
      %s49 = sphi 0, %s46
      %s50 = sphi 0, %s49
      %s66 = sphi 0, %s50
      %s70 = sphi 0, %s70
      %s72 = sphi 0, %s70
      %s73 = sphi 0, %s72
      %s87 = sphi 0, %s73
      %s91 = sphi 0, %s91
      %s93 = sphi 0, %s91
      %s94 = sphi 0, %s93
      %s108 = sphi 0, %s94
      %s116 = sphi 0, %s118
      %s119 = sphi 0, %s116
      %s120 = sphi 0, %s119
      %s136 = sphi 0, %s120
      %s144 = sphi 0, %s146
      %s147 = sphi 0, %s144
      %s148 = sphi 0, %s147
      %s164 = sphi 0, %s148
      %s172 = sphi 0, %s174
      %s175 = sphi 0, %s172
      %s176 = sphi 0, %s175
      %s192 = sphi 0, %s176
    $region4: #{tpu_custom_call.1} parent=1 // loop_header_branch
      %25 = sbr.rel (%p23) target = $region8
    $region5: #{tpu_custom_call.1} parent=1 // loop_body
      %s27 = ssub.s32 %s22, 1
      %s28 = ssub.s32 %s22, 2
      %s35 = sadd.s32 1, %s30
      %p36 = scmp.ge.s32.totalorder %s35, 1
      %s37 = scalar_select %p36, 0, %s35
      %s38 = sadd.s32 1, %s29
      %s39 = scalar_select %p36, %s38, %s29
      %p40 = scmp.ge.s32.totalorder %s39, 2
      %s41 = scalar_select %p40, 0, %s39
      %s42 = ssub.s32 %s29, %s41
      %s43 = ssub.s32 %s30, %s37
      %s44 = sor.u32 %s42, %s43
      %p45 = scmp.eq.s32.totalorder %s44, 0
      %s47 = sadd.s32 %s46, 1
      %s48 = scalar_select %p45, %s46, %s47
      %p51 = pneg %p45
      %p52 = scmp.eq.s32.totalorder %s22, 1
      %p53 = por %p51, %p52
      %p54 = scmp.ne.s32.totalorder %s46, %s49
      %p55 = scmp.eq.s32.totalorder %s22, 0
      %p56 = por %p54, %p55
      %p57 = scmp.ne.s32.totalorder %s46, %s49
      %p58 = scmp.eq.s32.totalorder %s27, 1
      %p59 = por %p57, %p58
      %p60 = scmp.ne.s32.totalorder %s49, %s50
      %p61 = scmp.eq.s32.totalorder %s27, 0
      %p62 = por %p60, %p61
      %p63 = scmp.ne.s32.totalorder %s49, %s50
      %p64 = scmp.eq.s32.totalorder %s28, 1
      %p65 = por %p63, %p64
      %p67 = scmp.ne.s32.totalorder %s50, %s66
      %p68 = scmp.eq.s32.totalorder %s28, 0
      %p69 = por %p67, %p68
      %s71 = sadd.s32 %s70, 1
      %p74 = scmp.eq.s32.totalorder %s22, 1
      %p75 = scmp.ne.s32.totalorder %s70, %s72
      %p76 = scmp.eq.s32.totalorder %s22, 0
      %p77 = por %p75, %p76
      %p78 = scmp.ne.s32.totalorder %s70, %s72
      %p79 = scmp.eq.s32.totalorder %s27, 1
      %p80 = por %p78, %p79
      %p81 = scmp.ne.s32.totalorder %s72, %s73
      %p82 = scmp.eq.s32.totalorder %s27, 0
      %p83 = por %p81, %p82
      %p84 = scmp.ne.s32.totalorder %s72, %s73
      %p85 = scmp.eq.s32.totalorder %s28, 1
      %p86 = por %p84, %p85
      %p88 = scmp.ne.s32.totalorder %s73, %s87
      %p89 = scmp.eq.s32.totalorder %s28, 0
      %p90 = por %p88, %p89
      %s92 = sadd.s32 %s91, 1
      %p95 = scmp.eq.s32.totalorder %s22, 1
      %p96 = scmp.ne.s32.totalorder %s91, %s93
      %p97 = scmp.eq.s32.totalorder %s22, 0
      %p98 = por %p96, %p97
      %p99 = scmp.ne.s32.totalorder %s91, %s93
      %p100 = scmp.eq.s32.totalorder %s27, 1
      %p101 = por %p99, %p100
      %p102 = scmp.ne.s32.totalorder %s93, %s94
      %p103 = scmp.eq.s32.totalorder %s27, 0
      %p104 = por %p102, %p103
      %p105 = scmp.ne.s32.totalorder %s93, %s94
      %p106 = scmp.eq.s32.totalorder %s28, 1
      %p107 = por %p105, %p106
      %p109 = scmp.ne.s32.totalorder %s94, %s108
      %p110 = scmp.eq.s32.totalorder %s28, 0
      %p111 = por %p109, %p110
      %s112 = ssub.s32 %s29, %s41
      %s113 = ssub.s32 %s30, %s37
      %s114 = sor.u32 %s112, %s113
      %p115 = scmp.eq.s32.totalorder %s114, 0
      %s117 = sadd.s32 %s116, 1
      %s118 = scalar_select %p115, %s116, %s117
      %p121 = pneg %p115
      %p122 = scmp.eq.s32.totalorder %s22, 1
      %p123 = por %p121, %p122
      %p124 = scmp.ne.s32.totalorder %s116, %s119
      %p125 = scmp.eq.s32.totalorder %s22, 0
      %p126 = por %p124, %p125
      %p127 = scmp.ne.s32.totalorder %s116, %s119
      %p128 = scmp.eq.s32.totalorder %s27, 1
      %p129 = por %p127, %p128
      %p130 = scmp.ne.s32.totalorder %s119, %s120
      %p131 = scmp.eq.s32.totalorder %s27, 0
      %p132 = por %p130, %p131
      %p133 = scmp.ne.s32.totalorder %s119, %s120
      %p134 = scmp.eq.s32.totalorder %s28, 1
      %p135 = por %p133, %p134
      %p137 = scmp.ne.s32.totalorder %s120, %s136
      %p138 = scmp.eq.s32.totalorder %s28, 0
      %p139 = por %p137, %p138
      %s140 = ssub.s32 %s29, %s41
      %s141 = ssub.s32 %s30, %s37
      %s142 = sor.u32 %s140, %s141
      %p143 = scmp.eq.s32.totalorder %s142, 0
      %s145 = sadd.s32 %s144, 1
      %s146 = scalar_select %p143, %s144, %s145
      %p149 = pneg %p143
      %p150 = scmp.eq.s32.totalorder %s22, 1
      %p151 = por %p149, %p150
      %p152 = scmp.ne.s32.totalorder %s144, %s147
      %p153 = scmp.eq.s32.totalorder %s22, 0
      %p154 = por %p152, %p153
      %p155 = scmp.ne.s32.totalorder %s144, %s147
      %p156 = scmp.eq.s32.totalorder %s27, 1
      %p157 = por %p155, %p156
      %p158 = scmp.ne.s32.totalorder %s147, %s148
      %p159 = scmp.eq.s32.totalorder %s27, 0
      %p160 = por %p158, %p159
      %p161 = scmp.ne.s32.totalorder %s147, %s148
      %p162 = scmp.eq.s32.totalorder %s28, 1
      %p163 = por %p161, %p162
      %p165 = scmp.ne.s32.totalorder %s148, %s164
      %p166 = scmp.eq.s32.totalorder %s28, 0
      %p167 = por %p165, %p166
      %s168 = ssub.s32 %s29, %s41
      %s169 = ssub.s32 %s30, %s37
      %s170 = sor.u32 %s168, %s169
      %p171 = scmp.eq.s32.totalorder %s170, 0
      %s173 = sadd.s32 %s172, 1
      %s174 = scalar_select %p171, %s172, %s173
      %p177 = pneg %p171
      %p178 = scmp.eq.s32.totalorder %s22, 1
      %p179 = por %p177, %p178
      %p180 = scmp.ne.s32.totalorder %s172, %s175
      %p181 = scmp.eq.s32.totalorder %s22, 0
      %p182 = por %p180, %p181
      %p183 = scmp.ne.s32.totalorder %s172, %s175
      %p184 = scmp.eq.s32.totalorder %s27, 1
      %p185 = por %p183, %p184
      %p186 = scmp.ne.s32.totalorder %s175, %s176
      %p187 = scmp.eq.s32.totalorder %s27, 0
      %p188 = por %p186, %p187
      %p189 = scmp.ne.s32.totalorder %s175, %s176
      %p190 = scmp.eq.s32.totalorder %s28, 1
      %p191 = por %p189, %p190
      %p193 = scmp.ne.s32.totalorder %s176, %s192
      %p194 = scmp.eq.s32.totalorder %s28, 0
      %p195 = por %p193, %p194
      %p196 = scmp.le.s32.totalorder 1, %s22
      %p197 = scmp.lt.s32.totalorder %s22, 3
      %p198 = pnand %p196, %p197
      %p199 = pneg %p198
      // Predicated region
      $region9: #{tpu_custom_call.1} parent=5 // pred_check
        _
      $region10: #{tpu_custom_call.1} parent=5 // pred_check_branch
        %201 = sbr.rel (%p198) target = $region12
      $region11: #{tpu_custom_call.1} parent=5 // pred_region
        %s202 = ssub.s32 %s22, 1
        // Predicated region
        $region13: #{tpu_custom_call.1} parent=11 // pred_check
          %p203 = pneg %p83
        $region14: #{tpu_custom_call.1} parent=11 // pred_check_branch
          %205 = sbr.rel (%p203) target = $region16
        $region15: #{tpu_custom_call.1} parent=11 // pred_region
          %s207 = ssub.s32 256, 256
          %208 = vsyncadd [#allocation6], %s207
          %s209 = sshll.u32 [#allocation5], 4
          %s210 = int_to_ptr.vmem [resolvable:$true] %s209
          %215 = dma.hbm_to_vmem [thread:$0]  %s1, 256, %s210, [#allocation6], 64, 64, 4
        $region16: #{tpu_custom_call.1} parent=11 // pred_fallthru
          _
        // Predicated region
        $region17: #{tpu_custom_call.1} parent=11 // pred_check
          %p216 = pneg %p104
        $region18: #{tpu_custom_call.1} parent=11 // pred_check_branch
          %218 = sbr.rel (%p216) target = $region20
        $region19: #{tpu_custom_call.1} parent=11 // pred_region
          _
        $region20: #{tpu_custom_call.1} parent=11 // pred_fallthru
          _
      $region12: #{tpu_custom_call.1} parent=5 // pred_fallthru
        _
      %p219 = scmp.lt.s32.totalorder %s22, 2
      // Predicated region
      $region21: #{tpu_custom_call.1} parent=5 // pred_check
        %p220 = pneg %p219
      $region22: #{tpu_custom_call.1} parent=5 // pred_check_branch
        %222 = sbr.rel (%p220) target = $region24
      $region23: #{tpu_custom_call.1} parent=5 // pred_region
        // Predicated region
        $region25: #{tpu_custom_call.1} parent=23 // pred_check
          %p223 = pneg %p56
        $region26: #{tpu_custom_call.1} parent=23 // pred_check_branch
          %225 = sbr.rel (%p223) target = $region28
        $region27: #{tpu_custom_call.1} parent=23 // pred_region
          %s226 = sand.u32 %s46, 1
          %s227 = scalar_lea.sflag [#allocation3], %s226
          %s228 = sand.u32 %s46, 1
          %s229 = smul.addr %s228, 4
          %s230 = scalar_lea.vmem [#allocation2], %s229
          %s232 = ssub.s32 64, 64
          %233 = vsyncadd %s227, %s232
          %s234 = sadd.s32 %s30, %s29
          %s235 = smul.addr %s234, 64
          %s236 = scalar_lea.hbm %s0, %s235
          %s238 = sshll.u32 %s230, 4
          %s239 = int_to_ptr.vmem [resolvable:$true] %s238
          %241 = dma.hbm_to_vmem [thread:$0]  %s236, 64, %s239, %s227
        $region28: #{tpu_custom_call.1} parent=23 // pred_fallthru
          _
      $region24: #{tpu_custom_call.1} parent=5 // pred_fallthru
        _
      %p242 = scmp.le.s32.totalorder 1, %s22
      %p243 = scmp.lt.s32.totalorder %s22, 3
      %p244 = pnand %p242, %p243
      %p245 = pneg %p244
      // Predicated region
      $region29: #{tpu_custom_call.1} parent=5 // pred_check
        _
      $region30: #{tpu_custom_call.1} parent=5 // pred_check_branch
        %247 = sbr.rel (%p244) target = $region32
      $region31: #{tpu_custom_call.1} parent=5 // pred_region
        %s248 = ssub.s32 %s22, 1
        %s249 = sand.u32 %s49, 1
        %s250 = scalar_lea.sflag [#allocation3], %s249
        %s251 = sand.u32 %s49, 1
        %s252 = smul.addr %s251, 4
        %s253 = scalar_lea.vmem [#allocation2], %s252
        // Predicated region
        $region33: #{tpu_custom_call.1} parent=31 // pred_check
          %p254 = pneg %p62
        $region34: #{tpu_custom_call.1} parent=31 // pred_check_branch
          %256 = sbr.rel (%p254) target = $region36
        $region35: #{tpu_custom_call.1} parent=31 // pred_region
          %257 = dma.done %s250, 64
        $region36: #{tpu_custom_call.1} parent=31 // pred_fallthru
          _
        // Predicated region
        $region37: #{tpu_custom_call.1} parent=31 // pred_check
          %p258 = pneg %p83
        $region38: #{tpu_custom_call.1} parent=31 // pred_check_branch
          %260 = sbr.rel (%p258) target = $region40
        $region39: #{tpu_custom_call.1} parent=31 // pred_region
          %261 = dma.done [#allocation6], 256
        $region40: #{tpu_custom_call.1} parent=31 // pred_fallthru
          _
        %s262 = sand.u32 %s49, 1
        %s263 = scalar_lea.sflag [#allocation3], %s262
        %s264 = sand.u32 %s49, 1
        %s265 = smul.addr %s264, 4
        %s266 = scalar_lea.vmem [#allocation2], %s265
        %p267 = pneg %p62
        %p268 = pneg %p59
        %p269 = pneg %p83
        %p270 = pneg %p80
        %p271 = pneg %p104
        %p272 = pneg %p101
        %p273 = pneg %p132
        %p274 = pneg %p129
        %s275 = sand.u32 %s119, 1
        %s276 = scalar_lea.sflag [#allocation4], %s275
        %s277 = sand.u32 %s119, 1
        %s278 = smul.addr %s277, 4
        %s279 = scalar_lea.vmem [#allocation7], %s278
        %p280 = pneg %p160
        %p281 = pneg %p157
        %s282 = sand.u32 %s27, 1
        %s283 = scalar_lea.sflag [#allocation9], %s282
        %s284 = sand.u32 %s147, 1
        %s285 = smul.addr %s284, 4
        %s286 = scalar_lea.vmem [#allocation8], %s285
        %p287 = pneg %p188
        %p288 = pneg %p185
        %s289 = sand.u32 %s27, 1
        %s290 = scalar_lea.sflag [#allocation9], %s289
        %s291 = sand.u32 %s175, 1
        %s292 = smul.addr %s291, 4
        %s293 = scalar_lea.vmem [#allocation10], %s292
        %v295 = vld [vmem:[%s253] sm:$0xf]
        %v296 = vld [vmem:[#allocation5] sm:$0xf]
        %v297 = vld [vmem:[#allocation5 + $0x4] sm:$0xf]
        %v298 = vld [vmem:[#allocation5 + $0x8] sm:$0xf]
        %v299 = vld [vmem:[#allocation5 + $0xc] sm:$0xf]
        %v300 = vld [vmem:[%s2] sm:$0x1]
        %v302 = vlaneseq
        %v303 = vshrl.u32 %v302, 7
        %v304 = vsub.s32 0, %v303
        %v305 = vrot.slane %v300, %v304
        %v311 = vunpack.c.l.b16 %v296
        %v312 = vunpack.c.l.b16 %v297
        %v313 = vunpack.c.l.b16 %v298
        %v314 = vunpack.c.l.b16 %v299
        %v315 = vpack.c.b16 %v312, %v311
        %v316 = vpack.c.b16 %v314, %v313
        %vm319 = vcmask 261120
        %v321 = vsel %vm319, %v295, 0
        %323 = vmatprep.subr.bf16.mxu0 0
        %324 = vmatpush1.bf16.msra.mxu0 %v315
        %325 = vmatprep.subr.bf16.mxu0 0
        %326 = vmatpush1.bf16.msra.mxu0 %v316
        %327 = vmatprep.subr.bf16.mxu0 0
        %328 = vmatpush1.bf16.msra.mxu0 0
        %329 = vmatprep.subr.bf16.mxu0 0
        %330 = vmatpush1.bf16.msra.mxu0 0
        %331 = vmatprep.subr.bf16.mxu0 0
        %332 = vmatpush1.bf16.msra.mxu0 0
        %333 = vmatprep.subr.bf16.mxu0 0
        %334 = vmatpush1.bf16.msra.mxu0 0
        %335 = vmatprep.subr.bf16.mxu0 0
        %336 = vmatpush1.bf16.msra.mxu0 0
        %337 = vmatprep.subr.bf16.mxu0 0
        %338 = vmatpush1.bf16.msra.mxu0 0
        %339 = vmatprep.subr.bf16.mxu0 0
        %340 = vmatpush1.bf16.msra.mxu0 0
        %341 = vmatprep.subr.bf16.mxu0 0
        %342 = vmatpush1.bf16.msra.mxu0 0
        %343 = vmatprep.subr.bf16.mxu0 0
        %344 = vmatpush1.bf16.msra.mxu0 0
        %345 = vmatprep.subr.bf16.mxu0 0
        %346 = vmatpush1.bf16.msra.mxu0 0
        %347 = vmatprep.subr.bf16.mxu0 0
        %348 = vmatpush1.bf16.msra.mxu0 0
        %349 = vmatprep.subr.bf16.mxu0 0
        %350 = vmatpush1.bf16.msra.mxu0 0
        %351 = vmatprep.subr.bf16.mxu0 0
        %352 = vmatpush1.bf16.msra.mxu0 0
        %353 = vmatprep.subr.bf16.mxu0 0
        %354 = vmatpush1.bf16.msra.mxu0 0
        %355 = vmatprep.mubr.bf16.mxu0 0
        %356 = vmatmul.mubr.bf16.gmra.mrb[0].mxu0 %v321
        %v357 = vpop.f32.mrb[0].mxu0
        %v358 = vadd.f32 %v305, %v357
        %v359 = vpop.f32.mrb[0].mxu0
        %v360 = vpop.f32.mrb[0].mxu0
        %v361 = vpop.f32.mrb[0].mxu0
        %362 = vdwg.mxu0
        %v363 = vmul.f32 %v358, 0.35355338
        %v364 = vpack.c.bf16 %v363, %v363
        %vm365 = vcmask 257024
        %366 = vst.msk [vmem:[%s279] sm:$0xf] %vm365, %v364
        %v367 = vpack.c.bf16 %v358, %v358
        %v369 = vunpack.c.l.b16 %v367
        %v370 = vpack.c.b16 %v369, %v369
        %371 = vrot.lane.b32.xlu0 %v370, 96
        %v372 = vpop.permute.xlu0 %371
        %374 = vst.msk [vmem:[%s286] sm:$0xf] %vm365, %v372
        %375 = vrot.lane.b32.xlu0 %v370, 64
        %v376 = vpop.permute.xlu0 %375
        %378 = vst.msk [vmem:[%s293] sm:$0xf] %vm365, %v376
        %s379 = sand.u32 %s119, 1
        %s380 = scalar_lea.sflag [#allocation4], %s379
        %s381 = sand.u32 %s119, 1
        %s382 = smul.addr %s381, 4
        %s383 = scalar_lea.vmem [#allocation7], %s382
        %s384 = sand.u32 %s27, 1
        %s385 = scalar_lea.sflag [#allocation9], %s384
        %s386 = sand.u32 %s147, 1
        %s387 = smul.addr %s386, 4
        %s388 = scalar_lea.vmem [#allocation8], %s387
        %s389 = sand.u32 %s27, 1
        %s390 = scalar_lea.sflag [#allocation9], %s389
        %s391 = sand.u32 %s175, 1
        %s392 = smul.addr %s391, 4
        %s393 = scalar_lea.vmem [#allocation10], %s392
        // Predicated region
        $region41: #{tpu_custom_call.1} parent=31 // pred_check
          %p394 = pneg %p129
        $region42: #{tpu_custom_call.1} parent=31 // pred_check_branch
          %396 = sbr.rel (%p394) target = $region44
        $region43: #{tpu_custom_call.1} parent=31 // pred_region
          %s398 = ssub.s32 64, 64
          %399 = vsyncadd %s380, %s398
          %s400 = sadd.s32 %s32, %s31
          %s401 = smul.addr %s400, 64
          %s402 = scalar_lea.hbm %s3, %s401
          %s404 = sshll.u32 %s383, 4
          %s405 = int_to_ptr.vmem [resolvable:$true] %s404
          %407 = dma.vmem_to_hbm [thread:$0]  %s405, 64, %s402, %s380
        $region44: #{tpu_custom_call.1} parent=31 // pred_fallthru
          _
        // Predicated region
        $region45: #{tpu_custom_call.1} parent=31 // pred_check
          %p408 = pneg %p157
        $region46: #{tpu_custom_call.1} parent=31 // pred_check_branch
          %410 = sbr.rel (%p408) target = $region48
        $region47: #{tpu_custom_call.1} parent=31 // pred_region
          %s412 = ssub.s32 64, 64
          %413 = vsyncadd %s385, %s412
          %s414 = sadd.s32 %s32, %s31
          %s415 = smul.addr %s414, 64
          %s416 = scalar_lea.hbm %s4, %s415
          %s418 = sshll.u32 %s388, 4
          %s419 = int_to_ptr.vmem [resolvable:$true] %s418
          %421 = dma.vmem_to_hbm [thread:$0]  %s419, 64, %s416, %s385
        $region48: #{tpu_custom_call.1} parent=31 // pred_fallthru
          _
        // Predicated region
        $region49: #{tpu_custom_call.1} parent=31 // pred_check
          %p422 = pneg %p185
        $region50: #{tpu_custom_call.1} parent=31 // pred_check_branch
          %424 = sbr.rel (%p422) target = $region52
        $region51: #{tpu_custom_call.1} parent=31 // pred_region
          %s426 = ssub.s32 64, 64
          %427 = vsyncadd %s390, %s426
          %s428 = sadd.s32 %s32, %s31
          %s429 = smul.addr %s428, 64
          %s430 = scalar_lea.hbm %s5, %s429
          %s432 = sshll.u32 %s393, 4
          %s433 = int_to_ptr.vmem [resolvable:$true] %s432
          %435 = dma.vmem_to_hbm [thread:$0]  %s433, 64, %s430, %s390
        $region52: #{tpu_custom_call.1} parent=31 // pred_fallthru
          _
      $region32: #{tpu_custom_call.1} parent=5 // pred_fallthru
        _
      %p436 = scmp.le.s32.totalorder 2, %s22
      // Predicated region
      $region53: #{tpu_custom_call.1} parent=5 // pred_check
        %p437 = pneg %p436
      $region54: #{tpu_custom_call.1} parent=5 // pred_check_branch
        %439 = sbr.rel (%p437) target = $region56
      $region55: #{tpu_custom_call.1} parent=5 // pred_region
        %s440 = ssub.s32 %s22, 2
        // Predicated region
        $region57: #{tpu_custom_call.1} parent=55 // pred_check
          %p441 = pneg %p135
        $region58: #{tpu_custom_call.1} parent=55 // pred_check_branch
          %443 = sbr.rel (%p441) target = $region60
        $region59: #{tpu_custom_call.1} parent=55 // pred_region
          %s444 = sand.u32 %s120, 1
          %s445 = scalar_lea.sflag [#allocation4], %s444
          %s446 = sand.u32 %s120, 1
          %s447 = smul.addr %s446, 4
          %s448 = scalar_lea.vmem [#allocation7], %s447
          %449 = dma.done %s445, 64
        $region60: #{tpu_custom_call.1} parent=55 // pred_fallthru
          _
        // Predicated region
        $region61: #{tpu_custom_call.1} parent=55 // pred_check
          %p450 = pneg %p163
        $region62: #{tpu_custom_call.1} parent=55 // pred_check_branch
          %452 = sbr.rel (%p450) target = $region64
        $region63: #{tpu_custom_call.1} parent=55 // pred_region
          %s453 = sand.u32 %s28, 1
          %s454 = scalar_lea.sflag [#allocation9], %s453
          %s455 = sand.u32 %s148, 1
          %s456 = smul.addr %s455, 4
          %s457 = scalar_lea.vmem [#allocation8], %s456
          %458 = dma.done %s454, 64
        $region64: #{tpu_custom_call.1} parent=55 // pred_fallthru
          _
        // Predicated region
        $region65: #{tpu_custom_call.1} parent=55 // pred_check
          %p459 = pneg %p191
        $region66: #{tpu_custom_call.1} parent=55 // pred_check_branch
          %461 = sbr.rel (%p459) target = $region68
        $region67: #{tpu_custom_call.1} parent=55 // pred_region
          %s462 = sand.u32 %s28, 1
          %s463 = scalar_lea.sflag [#allocation9], %s462
          %s464 = sand.u32 %s176, 1
          %s465 = smul.addr %s464, 4
          %s466 = scalar_lea.vmem [#allocation10], %s465
          %467 = dma.done %s463, 64
        $region68: #{tpu_custom_call.1} parent=55 // pred_fallthru
          _
      $region56: #{tpu_custom_call.1} parent=5 // pred_fallthru
        _
    $region6: #{tpu_custom_call.1} parent=1 // loop_footer
      %s26 = sadd.s32 1, %s22
    $region7: #{tpu_custom_call.1} parent=1 // loop_footer_branch
      %21 = sbr.rel target = $region3
    $region8: #{tpu_custom_call.1} parent=1 // loop_exit
      _
    %468 = vsyncpa [#allocation3], 1
    %s469 = scalar_lea.sflag [#allocation3], 1
    %470 = vsyncpa %s469, 1
    %471 = vsyncpa [#allocation6], 1
    %472 = vsyncpa [#allocation4], 1
    %s473 = scalar_lea.sflag [#allocation4], 1
    %474 = vsyncpa %s473, 1
    %475 = vsyncpa [#allocation9], 1
    %s476 = scalar_lea.sflag [#allocation9], 1
    %477 = vsyncpa %s476, 1

</llo_original>
